<compile_context>
chip_gen: v5e
topology: v5e:2x2
jax: 0.10.0
libtpu: 0.0.40
codegen_flags: <defaults>
</compile_context>

<pallas_src>
import functools

import jax
import jax.numpy as jnp
from jax.experimental import pallas as pl
from jax.experimental.pallas import tpu as pltpu


def l2normalize(v, eps=1e-12):
    return v / (jnp.linalg.norm(v) + eps)


# ---------------------------------------------------------------------------
# Fused Pallas kernel: spectral-norm power iteration + normalized 1x1 conv
# ---------------------------------------------------------------------------
def _spectral_norm_conv1x1_kernel(x_ref, w_ref, b_ref, u_ref,
                                  y_ref, u_out_ref, v_out_ref,
                                  *, power_iterations):
    eps = 1e-12
    w = w_ref[...]                       # (Cout, Cin)  == w_bar.view(height, -1)
    u = u_ref[...]                       # (Cout, 1)
    b = b_ref[...]                       # (Cout, 1)

    v = None
    wv = None
    for _ in range(power_iterations):    # static, tiny (default 1)
        # v = l2normalize(w^T u): VPU broadcast-multiply + XLU sublane reduce.
        v_raw = jnp.sum(w * u, axis=0, keepdims=True)               # (1, Cin)
        v = v_raw / (jnp.sqrt(jnp.sum(v_raw * v_raw)) + eps)
        # u = l2normalize(w v): lane reduce.
        wv = jnp.sum(w * v, axis=1, keepdims=True)                  # (Cout, 1)
        u = wv / (jnp.sqrt(jnp.sum(wv * wv)) + eps)

    sigma = jnp.sum(u * wv)              # u . (w v)
    w_sn = w * (1.0 / sigma)             # weight = w_bar / sigma.expand_as(w_bar)

    # Wrapped module (SATNet usage): 1x1 Conv2d == per-sample (Cout,Cin) @ (Cin,H*W) matmul.
    # TODO(synk): SpectralNorm wrapping convs with kh,kw > 1 would need a halo'd conv matmul;
    # SATNet only wraps 1x1 convs (SelfAttention projections), which is what is fused here.
    n = x_ref.shape[0]
    for i in range(n):                   # static tiny batch loop, one MXU push each
        y_ref[i] = jnp.dot(w_sn, x_ref[i],
                           preferred_element_type=jnp.float32) + b

    u_out_ref[...] = u                   # updated power-iteration buffers
    v_out_ref[...] = v


# ---------------------------------------------------------------------------
# Wrapper
# ---------------------------------------------------------------------------
def spectral_norm_conv1x1_forward(x, params, power_iterations=1):
    """SpectralNorm(nn.Conv2d(Cin, Cout, 1)).forward(x).

    x: (N, Cin, H, W) float32 (NCHW, as in PyTorch).
    params: {"w_bar": (Cout, Cin, 1, 1), "b": (Cout,), "u": (Cout,), "v": (Cin,)}.
    Returns (y, u_new, v_new) — PyTorch mutates the u/v buffers in place during forward;
    here they are returned.  (The initial v buffer is overwritten before use, matching
    the reference, so params["v"] only seeds the state and is not read by the math.)
    """
    n, cin, h, w = x.shape
    cout = params["w_bar"].shape[0]
    L = h * w

    x3 = x.reshape(n, cin, L)                       # free reshape of NCHW, no transpose
    w2 = params["w_bar"].reshape(cout, cin)         # w.view(height, -1)
    b2 = params["b"].reshape(cout, 1)
    u2 = params["u"].reshape(cout, 1)

    kernel = functools.partial(_spectral_norm_conv1x1_kernel,
                               power_iterations=power_iterations)
    y, u_new, v_new = pl.pallas_call(
        kernel,
        out_shape=(jax.ShapeDtypeStruct((n, cout, L), jnp.float32),
                   jax.ShapeDtypeStruct((cout, 1), jnp.float32),
                   jax.ShapeDtypeStruct((1, cin), jnp.float32)),
        grid=(1,),                                   # whole problem VMEM-resident, one step
        in_specs=[pl.BlockSpec((n, cin, L), lambda i: (0, 0, 0)),
                  pl.BlockSpec((cout, cin), lambda i: (0, 0)),
                  pl.BlockSpec((cout, 1), lambda i: (0, 0)),
                  pl.BlockSpec((cout, 1), lambda i: (0, 0))],
        out_specs=(pl.BlockSpec((n, cout, L), lambda i: (0, 0, 0)),
                   pl.BlockSpec((cout, 1), lambda i: (0, 0)),
                   pl.BlockSpec((1, cin), lambda i: (0, 0))),
        compiler_params=pltpu.CompilerParams(dimension_semantics=("arbitrary",)),
    )(x3, w2, b2, u2)

    return y.reshape(n, cout, h, w), u_new.reshape(cout), v_new.reshape(cin)


# ---------------------------------------------------------------------------
# Pure-JAX reference (mirrors SpectralNorm._update_u_v + Conv2d forward)
# ---------------------------------------------------------------------------
def _reference_forward(x, params, power_iterations=1):
    w = params["w_bar"]
    cout = w.shape[0]
    w2 = w.reshape(cout, -1)
    u = params["u"]
    v = params["v"]
    for _ in range(power_iterations):
        v = l2normalize(w2.T @ u)
        u = l2normalize(w2 @ v)
    sigma = jnp.dot(u, w2 @ v)
    w_sn = w / sigma
    y = jax.lax.conv_general_dilated(
        x, w_sn, window_strides=(1, 1), padding="VALID",
        dimension_numbers=("NCHW", "OIHW", "NCHW"),
        precision=jax.lax.Precision.HIGHEST)
    y = y + params["b"].reshape(1, -1, 1, 1)
    return y, u, v


# ---------------------------------------------------------------------------
if __name__ == "__main__":
    key = jax.random.PRNGKey(0)
    kx, kw, kb, ku, kv = jax.random.split(key, 5)

    # SATNet SelfAttention query/key projection: SpectralNorm(Conv2d(C, C//8, 1)) with C=32.
    N, CIN, H, W = 2, 32, 16, 16
    COUT = CIN // 8

    x = jax.random.normal(kx, (N, CIN, H, W), jnp.float32)
    params = {
        "w_bar": jax.random.normal(kw, (COUT, CIN, 1, 1), jnp.float32) / jnp.sqrt(CIN),
        "b": 0.01 * jax.random.normal(kb, (COUT,), jnp.float32),
        "u": l2normalize(jax.random.normal(ku, (COUT,), jnp.float32)),
        "v": l2normalize(jax.random.normal(kv, (CIN,), jnp.float32)),
    }

    fwd = jax.jit(spectral_norm_conv1x1_forward)
    y, u_new, v_new = fwd(x, params)
    jax.block_until_ready((y, u_new, v_new))

    y_ref, u_ref, v_ref = _reference_forward(x, params)
    assert y.shape == (N, COUT, H, W), y.shape
    assert bool(jnp.all(jnp.isfinite(y)))
    assert float(jnp.max(jnp.abs(y - y_ref))) < 1e-2, float(jnp.max(jnp.abs(y - y_ref)))
    assert float(jnp.max(jnp.abs(u_new - u_ref))) < 1e-3
    assert float(jnp.max(jnp.abs(v_new - v_ref))) < 1e-3
    print("KERNEL_OK")
</pallas_src>

<mosaic_0001>
module attributes {stable_mosaic.version = 11 : i64} {
  func.func @_spectral_norm_conv1x1_kernel(%arg0: i32, %arg1: memref<2x32x256xf32, #tpu.memory_space<vmem>>, %arg2: memref<4x32xf32, #tpu.memory_space<vmem>>, %arg3: memref<4x1xf32, #tpu.memory_space<vmem>>, %arg4: memref<4x1xf32, #tpu.memory_space<vmem>>, %arg5: memref<2x4x256xf32, #tpu.memory_space<vmem>>, %arg6: memref<4x1xf32, #tpu.memory_space<vmem>>, %arg7: memref<1x32xf32, #tpu.memory_space<vmem>>) attributes {dimension_semantics = [#tpu.dimension_semantics<arbitrary>], iteration_bounds = array<i64: 1>, scalar_prefetch = 0 : i64, scratch_operands = 0 : i64, tpu.core_type = #tpu.core_type<tc>, window_params = [{pipeline_mode = #tpu.pipeline_mode<synchronous>, transform_indices = @transform_0, window_bounds = array<i64: 2, 32, 256>}, {pipeline_mode = #tpu.pipeline_mode<synchronous>, transform_indices = @transform_1, window_bounds = array<i64: 4, 32>}, {pipeline_mode = #tpu.pipeline_mode<synchronous>, transform_indices = @transform_2, window_bounds = array<i64: 4, 1>}, {pipeline_mode = #tpu.pipeline_mode<synchronous>, transform_indices = @transform_3, window_bounds = array<i64: 4, 1>}, {pipeline_mode = #tpu.pipeline_mode<synchronous>, transform_indices = @transform_4, window_bounds = array<i64: 2, 4, 256>}, {pipeline_mode = #tpu.pipeline_mode<synchronous>, transform_indices = @transform_5, window_bounds = array<i64: 4, 1>}, {pipeline_mode = #tpu.pipeline_mode<synchronous>, transform_indices = @transform_6, window_bounds = array<i64: 1, 32>}]} {
    %c0 = arith.constant 0 : index
    %c0_0 = arith.constant 0 : index
    %0 = vector.load %arg2[%c0, %c0_0] : memref<4x32xf32, #tpu.memory_space<vmem>>, vector<4x32xf32>
    %c0_1 = arith.constant 0 : index
    %c0_2 = arith.constant 0 : index
    %1 = vector.load %arg4[%c0_1, %c0_2] : memref<4x1xf32, #tpu.memory_space<vmem>>, vector<4x1xf32>
    %c0_3 = arith.constant 0 : index
    %c0_4 = arith.constant 0 : index
    %2 = vector.load %arg3[%c0_3, %c0_4] : memref<4x1xf32, #tpu.memory_space<vmem>>, vector<4x1xf32>
    %3 = vector.broadcast %1 : vector<4x1xf32> to vector<4x32xf32>
    %4 = arith.mulf %0, %3 : vector<4x32xf32>
    %cst = arith.constant dense<0.000000e+00> : vector<32xf32>
    %5 = vector.multi_reduction <add>, %4, %cst [0] : vector<4x32xf32> to vector<32xf32>
    %6 = vector.shape_cast %5 : vector<32xf32> to vector<1x32xf32>
    %7 = arith.mulf %6, %6 : vector<1x32xf32>
    %8 = vector.shape_cast %7 : vector<1x32xf32> to vector<1x1x32xf32>
    %cst_5 = arith.constant dense<0.000000e+00> : vector<1xf32>
    %9 = vector.multi_reduction <add>, %8, %cst_5 [1, 2] : vector<1x1x32xf32> to vector<1xf32>
    %10 = vector.shape_cast %9 : vector<1xf32> to vector<1x1x1xf32>
    %11 = vector.extract %10[0, 0, 0] : f32 from vector<1x1x1xf32>
    %12 = math.sqrt %11 : f32
    %cst_6 = arith.constant 9.99999996E-13 : f32
    %13 = arith.addf %12, %cst_6 : f32
    %14 = vector.broadcast %13 : f32 to vector<1x32xf32>
    %15 = arith.divf %6, %14 : vector<1x32xf32>
    %16 = vector.broadcast %15 : vector<1x32xf32> to vector<4x32xf32>
    %17 = arith.mulf %0, %16 : vector<4x32xf32>
    %cst_7 = arith.constant dense<0.000000e+00> : vector<4xf32>
    %18 = vector.multi_reduction <add>, %17, %cst_7 [1] : vector<4x32xf32> to vector<4xf32>
    %19 = vector.shape_cast %18 : vector<4xf32> to vector<4x1xf32>
    %20 = arith.mulf %19, %19 : vector<4x1xf32>
    %21 = vector.shape_cast %20 : vector<4x1xf32> to vector<1x4x1xf32>
    %cst_8 = arith.constant dense<0.000000e+00> : vector<1xf32>
    %22 = vector.multi_reduction <add>, %21, %cst_8 [1, 2] : vector<1x4x1xf32> to vector<1xf32>
    %23 = vector.shape_cast %22 : vector<1xf32> to vector<1x1x1xf32>
    %24 = vector.extract %23[0, 0, 0] : f32 from vector<1x1x1xf32>
    %25 = math.sqrt %24 : f32
    %cst_9 = arith.constant 9.99999996E-13 : f32
    %26 = arith.addf %25, %cst_9 : f32
    %27 = vector.broadcast %26 : f32 to vector<4x1xf32>
    %28 = arith.divf %19, %27 : vector<4x1xf32>
    %29 = arith.mulf %28, %19 : vector<4x1xf32>
    %30 = vector.shape_cast %29 : vector<4x1xf32> to vector<1x4x1xf32>
    %cst_10 = arith.constant dense<0.000000e+00> : vector<1xf32>
    %31 = vector.multi_reduction <add>, %30, %cst_10 [1, 2] : vector<1x4x1xf32> to vector<1xf32>
    %32 = vector.shape_cast %31 : vector<1xf32> to vector<1x1x1xf32>
    %33 = vector.extract %32[0, 0, 0] : f32 from vector<1x1x1xf32>
    %cst_11 = arith.constant 1.000000e+00 : f32
    %34 = arith.divf %cst_11, %33 : f32
    %35 = vector.broadcast %34 : f32 to vector<4x32xf32>
    %36 = arith.mulf %0, %35 : vector<4x32xf32>
    %c0_12 = arith.constant 0 : index
    %c0_13 = arith.constant 0 : index
    %c0_14 = arith.constant 0 : index
    %37 = vector.load %arg1[%c0_12, %c0_13, %c0_14] : memref<2x32x256xf32, #tpu.memory_space<vmem>>, vector<1x32x256xf32>
    %38 = vector.shape_cast %37 : vector<1x32x256xf32> to vector<32x256xf32>
    %cst_15 = arith.constant dense<0.000000e+00> : vector<4x256xf32>
    %39 = tpu.matmul %36, %38, %cst_15 {dimension_numbers = #tpu.dot_dimension_numbers<[1], [0], [0], [1], [0, 0, 1, 1], [], []>} : vector<4x32xf32>, vector<32x256xf32>, vector<4x256xf32> -> vector<4x256xf32>
    %40 = vector.broadcast %2 : vector<4x1xf32> to vector<4x256xf32>
    %41 = arith.addf %39, %40 : vector<4x256xf32>
    %c0_16 = arith.constant 0 : index
    %c0_17 = arith.constant 0 : index
    %c0_18 = arith.constant 0 : index
    %42 = vector.load %arg5[%c0_16, %c0_17, %c0_18] : memref<2x4x256xf32, #tpu.memory_space<vmem>>, vector<1x4x256xf32>
    %43 = vector.shape_cast %42 : vector<1x4x256xf32> to vector<4x256xf32>
    %44 = vector.shape_cast %41 : vector<4x256xf32> to vector<1x4x256xf32>
    tpu.vector_store %arg5[%c0_16, %c0_17, %c0_18], %44 {strides = array<i32>} : memref<2x4x256xf32, #tpu.memory_space<vmem>>, vector<1x4x256xf32>,
    %c1 = arith.constant 1 : index
    %c0_19 = arith.constant 0 : index
    %c0_20 = arith.constant 0 : index
    %45 = vector.load %arg1[%c1, %c0_19, %c0_20] : memref<2x32x256xf32, #tpu.memory_space<vmem>>, vector<1x32x256xf32>
    %46 = vector.shape_cast %45 : vector<1x32x256xf32> to vector<32x256xf32>
    %cst_21 = arith.constant dense<0.000000e+00> : vector<4x256xf32>
    %47 = tpu.matmul %36, %46, %cst_21 {dimension_numbers = #tpu.dot_dimension_numbers<[1], [0], [0], [1], [0, 0, 1, 1], [], []>} : vector<4x32xf32>, vector<32x256xf32>, vector<4x256xf32> -> vector<4x256xf32>
    %48 = vector.broadcast %2 : vector<4x1xf32> to vector<4x256xf32>
    %49 = arith.addf %47, %48 : vector<4x256xf32>
    %c1_22 = arith.constant 1 : index
    %c0_23 = arith.constant 0 : index
    %c0_24 = arith.constant 0 : index
    %50 = vector.load %arg5[%c1_22, %c0_23, %c0_24] : memref<2x4x256xf32, #tpu.memory_space<vmem>>, vector<1x4x256xf32>
    %51 = vector.shape_cast %50 : vector<1x4x256xf32> to vector<4x256xf32>
    %52 = vector.shape_cast %49 : vector<4x256xf32> to vector<1x4x256xf32>
    tpu.vector_store %arg5[%c1_22, %c0_23, %c0_24], %52 {strides = array<i32>} : memref<2x4x256xf32, #tpu.memory_space<vmem>>, vector<1x4x256xf32>,
    %c0_25 = arith.constant 0 : index
    %c0_26 = arith.constant 0 : index
    %53 = vector.load %arg6[%c0_25, %c0_26] : memref<4x1xf32, #tpu.memory_space<vmem>>, vector<4x1xf32>
    tpu.vector_store %arg6[%c0_25, %c0_26], %28 {strides = array<i32>} : memref<4x1xf32, #tpu.memory_space<vmem>>, vector<4x1xf32>,
    %c0_27 = arith.constant 0 : index
    %c0_28 = arith.constant 0 : index
    %54 = vector.load %arg7[%c0_27, %c0_28] : memref<1x32xf32, #tpu.memory_space<vmem>>, vector<1x32xf32>
    tpu.vector_store %arg7[%c0_27, %c0_28], %15 {strides = array<i32>} : memref<1x32xf32, #tpu.memory_space<vmem>>, vector<1x32xf32>,
    return
  }
  func.func @transform_0(%arg0: i32) -> (i32, i32, i32) {
    %c0_i32 = arith.constant 0 : i32
    %c0_i32_0 = arith.constant 0 : i32
    %c0_i32_1 = arith.constant 0 : i32
    %c0_i32_2 = arith.constant 0 : i32
    return %c0_i32, %c0_i32_0, %c0_i32_1 : i32, i32, i32
  }
  func.func @transform_1(%arg0: i32) -> (i32, i32) {
    %c0_i32 = arith.constant 0 : i32
    %c0_i32_0 = arith.constant 0 : i32
    %c0_i32_1 = arith.constant 0 : i32
    return %c0_i32, %c0_i32_0 : i32, i32
  }
  func.func @transform_2(%arg0: i32) -> (i32, i32) {
    %c0_i32 = arith.constant 0 : i32
    %c0_i32_0 = arith.constant 0 : i32
    %c0_i32_1 = arith.constant 0 : i32
    return %c0_i32, %c0_i32_0 : i32, i32
  }
  func.func @transform_3(%arg0: i32) -> (i32, i32) {
    %c0_i32 = arith.constant 0 : i32
    %c0_i32_0 = arith.constant 0 : i32
    %c0_i32_1 = arith.constant 0 : i32
    return %c0_i32, %c0_i32_0 : i32, i32
  }
  func.func @transform_4(%arg0: i32) -> (i32, i32, i32) {
    %c0_i32 = arith.constant 0 : i32
    %c0_i32_0 = arith.constant 0 : i32
    %c0_i32_1 = arith.constant 0 : i32
    %c0_i32_2 = arith.constant 0 : i32
    return %c0_i32, %c0_i32_0, %c0_i32_1 : i32, i32, i32
  }
  func.func @transform_5(%arg0: i32) -> (i32, i32) {
    %c0_i32 = arith.constant 0 : i32
    %c0_i32_0 = arith.constant 0 : i32
    %c0_i32_1 = arith.constant 0 : i32
    return %c0_i32, %c0_i32_0 : i32, i32
  }
  func.func @transform_6(%arg0: i32) -> (i32, i32) {
    %c0_i32 = arith.constant 0 : i32
    %c0_i32_0 = arith.constant 0 : i32
    %c0_i32_1 = arith.constant 0 : i32
    return %c0_i32, %c0_i32_0 : i32, i32
  }
}

</mosaic_0001>

<llo_original>
// kernel: spectral_norm_conv1x1_forward.1
$region0: #{spectral_norm_conv1x1_forward.1}
  #allocation0 [shape = 'u32[]', space=smem, size = 0x4, offset = 0x4, fixed_abs, tag = 'smem constant byte address 0x4 - core index']
  #allocation1 [shape = 'u32[72,128]{1,0:T(1,128)}', space=vmem, size = 0x9000, scoped, tag = 'internal scratch']
  %s0 = inlined_call_operand.vmem [shape: f32[2,32,256], index: 0, kind: input, shape index: {}]
  %s1 = inlined_call_operand.vmem [shape: f32[4,32], index: 1, kind: input, shape index: {}]
  %s2 = inlined_call_operand.vmem [shape: f32[4,1], index: 2, kind: input, shape index: {}]
  %s3 = inlined_call_operand.vmem [shape: f32[4,1], index: 3, kind: input, shape index: {}]
  %s4 = inlined_call_operand.vmem [shape: f32[2,4,256], index: 4, kind: output, shape index: {0}]
  %s5 = inlined_call_operand.vmem [shape: f32[4,1], index: 5, kind: output, shape index: {1}]
  %s6 = inlined_call_operand.hbm [shape: f32[1,32], index: 6, kind: output, shape index: {2}]
  %7 = xla_tuple %s4, %s5, %s6
  %s8 = sld [smem:[#allocation0]]
  $region42: #{spectral_norm_conv1x1_forward.1} parent=0
    _
  %s10 = ssub.s32 1, %s8
  %s11 = scalar_select 0, %s10, %s8
  $region1: #{spectral_norm_conv1x1_forward.1} parent=0
    #allocation2 [shape = 'u8[512]{0}', space=vmem, size = 0x400, scoped, tag = 'output window, operand 2, single buffered']
    #allocation3 [shape = 's32[1]{0}', space=sflag, size = 0x4, scoped, tag = 'scoped memory for spectral_norm_conv1x1_forward.1']
    %12 = vsyncpa [#allocation3], 0
    // Predicated region
    $region2: #{spectral_norm_conv1x1_forward.1} parent=1 // pred_check
      _
    $region3: #{spectral_norm_conv1x1_forward.1} parent=1 // pred_check_branch
      %14 = sbr.rel (0) target = $region5
    $region4: #{spectral_norm_conv1x1_forward.1} parent=1 // pred_region
      _
    $region5: #{spectral_norm_conv1x1_forward.1} parent=1 // pred_fallthru
      _
    // Predicated region
    $region6: #{spectral_norm_conv1x1_forward.1} parent=1 // pred_check
      _
    $region7: #{spectral_norm_conv1x1_forward.1} parent=1 // pred_check_branch
      %16 = sbr.rel (0) target = $region9
    $region8: #{spectral_norm_conv1x1_forward.1} parent=1 // pred_region
      _
    $region9: #{spectral_norm_conv1x1_forward.1} parent=1 // pred_fallthru
      _
    // Predicated region
    $region10: #{spectral_norm_conv1x1_forward.1} parent=1 // pred_check
      _
    $region11: #{spectral_norm_conv1x1_forward.1} parent=1 // pred_check_branch
      %18 = sbr.rel (0) target = $region13
    $region12: #{spectral_norm_conv1x1_forward.1} parent=1 // pred_region
      _
    $region13: #{spectral_norm_conv1x1_forward.1} parent=1 // pred_fallthru
      _
    // Predicated region
    $region14: #{spectral_norm_conv1x1_forward.1} parent=1 // pred_check
      _
    $region15: #{spectral_norm_conv1x1_forward.1} parent=1 // pred_check_branch
      %20 = sbr.rel (0) target = $region17
    $region16: #{spectral_norm_conv1x1_forward.1} parent=1 // pred_region
      _
    $region17: #{spectral_norm_conv1x1_forward.1} parent=1 // pred_fallthru
      _
    %v21 = vld [vmem:[%s1] sm:$0xf]
    %v22 = vld [vmem:[%s3] sm:$0xf]
    %v23 = vld [vmem:[%s2] sm:$0xf]
    %25 = vset.pattern.permute.xlu0 0
    %26 = vperm.xlu0 %25, %v22
    %v27 = vpop.permute.xlu0 %26
    %v29 = vmul.f32 %v21, %v27
    %vm30 = vcmask 257024
    %v31 = vsel %vm30, %v29, 0.0
    %v32 = vrot.slane %v31, 4
    %v33 = vadd.f32 %v31, %v32
    %v34 = vrot.slane %v33, 2
    %v35 = vadd.f32 %v33, %v34
    %v36 = vrot.slane %v35, 1
    %v37 = vadd.f32 %v35, %v36
    %v38 = vmul.f32 %v37, %v37
    %vm39 = vcmask 253952
    %v40 = vsel %vm39, %v38, 0.0
    %41 = vadd.xlane.f32.xlu0 %v40
    %v42 = vpop.xlane.xlu0 %41
    %v43 = vrot.slane %v42, 4
    %v44 = vadd.f32 %v42, %v43
    %v45 = vrot.slane %v44, 2
    %v46 = vadd.f32 %v44, %v45
    %v47 = vrot.slane %v46, 1
    %v48 = vadd.f32 %v46, %v47
    %s49 = vtos %v48
    %v50 = vstv %s49
    %v51 = vrsqrt.pop %v50
    %v52 = vmul.f32 %v51, %v50
    %v53 = vmul.f32 %v52, %v51
    %v54 = vmul.f32 0.5, %v53
    %v55 = vsub.f32 1.5, %v54
    %v56 = vmul.f32 %v51, %v55
    %v57 = vmul.f32 %v50, %v56
    %vm58 = vcmp.eq.f32.partialorder %v50, inf
    %v59 = vsel %vm58, %v50, %v57
    %vm60 = vcmp.eq.f32.partialorder %v50, 0.0
    %v61 = vand.u32 %v50, 2147483648
    %v62 = vsel %vm60, %v61, %v59
    %s63 = vtos %v62
    %s64 = sadd.f32 %s63, 1e-12
    %v65 = vstv %s64
    %v66 = vrcp.pop %v65
    %v67 = vmul.f32 %v65, %v66
    %v68 = vsub.f32 1.0, %v67
    %v69 = vmul.f32 %v66, %v68
    %v70 = vadd.f32 %v66, %v69
    %vm71 = vweird.f32 %v65
    %vm72 = vweird.f32 %v66
    %vm73 = vmor %vm71, %vm72
    %v74 = vsel %vm73, %v66, %v70
    %v75 = vand.u32 2147483647, %v65
    %vm76 = vcmp.eq.f32.partialorder %v75, 8.507059e+37
    %v77 = vand.u32 %v65, 2147483648
    %v78 = vor.u32 1.1754944e-38, %v77
    %v79 = vsel %vm76, %v78, %v74
    %v80 = vmul.f32 %v37, %v79
    %v81 = vmul.f32 %v21, %v80
    %v82 = vsel %vm30, %v81, 0.0
    %83 = vadd.xlane.f32.xlu0 %v82
    %v84 = vpop.xlane.xlu0 %83
    %v85 = vmul.f32 %v84, %v84
    %vm86 = vcmask 3072
    %v87 = vsel %vm86, %v85, 0.0
    %88 = vadd.xlane.f32.xlu0 %v87
    %v89 = vpop.xlane.xlu0 %88
    %v90 = vrot.slane %v89, 4
    %v91 = vadd.f32 %v89, %v90
    %v92 = vrot.slane %v91, 2
    %v93 = vadd.f32 %v91, %v92
    %v94 = vrot.slane %v93, 1
    %v95 = vadd.f32 %v93, %v94
    %s96 = vtos %v95
    %v97 = vstv %s96
    %v98 = vrsqrt.pop %v97
    %v99 = vmul.f32 %v98, %v97
    %v100 = vmul.f32 %v99, %v98
    %v101 = vmul.f32 0.5, %v100
    %v102 = vsub.f32 1.5, %v101
    %v103 = vmul.f32 %v98, %v102
    %v104 = vmul.f32 %v97, %v103
    %vm105 = vcmp.eq.f32.partialorder %v97, inf
    %v106 = vsel %vm105, %v97, %v104
    %vm107 = vcmp.eq.f32.partialorder %v97, 0.0
    %v108 = vand.u32 %v97, 2147483648
    %v109 = vsel %vm107, %v108, %v106
    %s110 = vtos %v109
    %s111 = sadd.f32 %s110, 1e-12
    %v112 = vstv %s111
    %v113 = vrcp.pop %v112
    %v114 = vmul.f32 %v112, %v113
    %v115 = vsub.f32 1.0, %v114
    %v116 = vmul.f32 %v113, %v115
    %v117 = vadd.f32 %v113, %v116
    %vm118 = vweird.f32 %v112
    %vm119 = vweird.f32 %v113
    %vm120 = vmor %vm118, %vm119
    %v121 = vsel %vm120, %v113, %v117
    %v122 = vand.u32 2147483647, %v112
    %vm123 = vcmp.eq.f32.partialorder %v122, 8.507059e+37
    %v124 = vand.u32 %v112, 2147483648
    %v125 = vor.u32 1.1754944e-38, %v124
    %v126 = vsel %vm123, %v125, %v121
    %v127 = vmul.f32 %v84, %v126
    %v128 = vmul.f32 %v127, %v84
    %v129 = vsel %vm86, %v128, 0.0
    %130 = vadd.xlane.f32.xlu0 %v129
    %v131 = vpop.xlane.xlu0 %130
    %v132 = vrot.slane %v131, 4
    %v133 = vadd.f32 %v131, %v132
    %v134 = vrot.slane %v133, 2
    %v135 = vadd.f32 %v133, %v134
    %v136 = vrot.slane %v135, 1
    %v137 = vadd.f32 %v135, %v136
    %s138 = vtos %v137
    %v139 = vstv %s138
    %v140 = vrcp.pop %v139
    %v141 = vmul.f32 %v139, %v140
    %v142 = vsub.f32 1.0, %v141
    %v143 = vmul.f32 %v140, %v142
    %v144 = vadd.f32 %v140, %v143
    %vm145 = vweird.f32 %v139
    %vm146 = vweird.f32 %v140
    %vm147 = vmor %vm145, %vm146
    %v148 = vsel %vm147, %v140, %v144
    %v149 = vand.u32 2147483647, %v139
    %vm150 = vcmp.eq.f32.partialorder %v149, 8.507059e+37
    %v151 = vand.u32 %v139, 2147483648
    %v152 = vor.u32 1.1754944e-38, %v151
    %v153 = vsel %vm150, %v152, %v148
    %s154 = vtos %v153
    %v155 = vstv %s154
    %v156 = vmul.f32 %v21, %v155
    %v157 = vld [vmem:[%s0] sm:$0xff]
    %v158 = vld [vmem:[%s0 + $0x8] sm:$0xff]
    %v159 = vld [vmem:[%s0 + $0x10] sm:$0xff]
    %v160 = vld [vmem:[%s0 + $0x18] sm:$0xff]
    %v161 = vld [vmem:[%s0 + $0x20] sm:$0xff]
    %v162 = vld [vmem:[%s0 + $0x28] sm:$0xff]
    %v163 = vld [vmem:[%s0 + $0x30] sm:$0xff]
    %v164 = vld [vmem:[%s0 + $0x38] sm:$0xff]
    %166 = vset.pattern.permute.xlu0 0
    %167 = vperm.xlu0 %166, %v23
    %v168 = vpop.permute.xlu0 %167
    %vm170 = vcmask 261120
    %v172 = vsel %vm170, %v156, 0
    %174 = vmatpush.msra.mxu0 0.0
    %175 = vmatpush.msra.mxu0 0.0
    %176 = vmatpush.msra.mxu0 0.0
    %177 = vmatpush.msra.mxu0 0.0
    %178 = vmatpush.msra.mxu0 0.0
    %179 = vmatpush.msra.mxu0 0.0
    %180 = vmatpush.msra.mxu0 0.0
    %181 = vmatpush.msra.mxu0 0.0
    %182 = vmatpush.msra.mxu0 0.0
    %183 = vmatpush.msra.mxu0 0.0
    %184 = vmatpush.msra.mxu0 0.0
    %185 = vmatpush.msra.mxu0 0.0
    %186 = vmatpush.msra.mxu0 %v163
    %187 = vmatpush.msra.mxu0 %v161
    %188 = vmatpush.msra.mxu0 %v159
    %189 = vmatpush.msra.mxu0 %v157
    %190 = vmatmul.f32.gmra.mxu0 %v172
    %v191 = vpop.f32.mrf.mxu0
    %v192 = vadd.f32 %v168, %v191
    %193 = vdwg.mxu0
    %194 = vmatpush.msra.mxu0 0.0
    %195 = vmatpush.msra.mxu0 0.0
    %196 = vmatpush.msra.mxu0 0.0
    %197 = vmatpush.msra.mxu0 0.0
    %198 = vmatpush.msra.mxu0 0.0
    %199 = vmatpush.msra.mxu0 0.0
    %200 = vmatpush.msra.mxu0 0.0
    %201 = vmatpush.msra.mxu0 0.0
    %202 = vmatpush.msra.mxu0 0.0
    %203 = vmatpush.msra.mxu0 0.0
    %204 = vmatpush.msra.mxu0 0.0
    %205 = vmatpush.msra.mxu0 0.0
    %206 = vmatpush.msra.mxu0 %v164
    %207 = vmatpush.msra.mxu0 %v162
    %208 = vmatpush.msra.mxu0 %v160
    %209 = vmatpush.msra.mxu0 %v158
    %210 = vmatmul.f32.gmra.mxu0 %v172
    %v211 = vpop.f32.mrf.mxu0
    %v212 = vadd.f32 %v168, %v211
    %213 = vdwg.mxu0
    %v216 = vrot.slane %v212, 4
    %vm217 = vcmask 1043456
    %v218 = vsel %vm217, %v192, %v216
    %220 = vst [vmem:[%s4] sm:$0xff] %v218
    %s221 = scalar_lea.vmem %s0, 64
    %v222 = vld [vmem:[%s221] sm:$0xff]
    %v223 = vld [vmem:[%s221 + $0x8] sm:$0xff]
    %v224 = vld [vmem:[%s221 + $0x10] sm:$0xff]
    %v225 = vld [vmem:[%s221 + $0x18] sm:$0xff]
    %v226 = vld [vmem:[%s221 + $0x20] sm:$0xff]
    %v227 = vld [vmem:[%s221 + $0x28] sm:$0xff]
    %v228 = vld [vmem:[%s221 + $0x30] sm:$0xff]
    %v229 = vld [vmem:[%s221 + $0x38] sm:$0xff]
    %230 = vmatpush.msra.mxu0 0.0
    %231 = vmatpush.msra.mxu0 0.0
    %232 = vmatpush.msra.mxu0 0.0
    %233 = vmatpush.msra.mxu0 0.0
    %234 = vmatpush.msra.mxu0 0.0
    %235 = vmatpush.msra.mxu0 0.0
    %236 = vmatpush.msra.mxu0 0.0
    %237 = vmatpush.msra.mxu0 0.0
    %238 = vmatpush.msra.mxu0 0.0
    %239 = vmatpush.msra.mxu0 0.0
    %240 = vmatpush.msra.mxu0 0.0
    %241 = vmatpush.msra.mxu0 0.0
    %242 = vmatpush.msra.mxu0 %v228
    %243 = vmatpush.msra.mxu0 %v226
    %244 = vmatpush.msra.mxu0 %v224
    %245 = vmatpush.msra.mxu0 %v222
    %246 = vmatmul.f32.gmra.mxu0 %v172
    %v247 = vpop.f32.mrf.mxu0
    %v248 = vadd.f32 %v168, %v247
    %249 = vdwg.mxu0
    %250 = vmatpush.msra.mxu0 0.0
    %251 = vmatpush.msra.mxu0 0.0
    %252 = vmatpush.msra.mxu0 0.0
    %253 = vmatpush.msra.mxu0 0.0
    %254 = vmatpush.msra.mxu0 0.0
    %255 = vmatpush.msra.mxu0 0.0
    %256 = vmatpush.msra.mxu0 0.0
    %257 = vmatpush.msra.mxu0 0.0
    %258 = vmatpush.msra.mxu0 0.0
    %259 = vmatpush.msra.mxu0 0.0
    %260 = vmatpush.msra.mxu0 0.0
    %261 = vmatpush.msra.mxu0 0.0
    %262 = vmatpush.msra.mxu0 %v229
    %263 = vmatpush.msra.mxu0 %v227
    %264 = vmatpush.msra.mxu0 %v225
    %265 = vmatpush.msra.mxu0 %v223
    %266 = vmatmul.f32.gmra.mxu0 %v172
    %v267 = vpop.f32.mrf.mxu0
    %v268 = vadd.f32 %v168, %v267
    %269 = vdwg.mxu0
    %v272 = vrot.slane %v268, 4
    %v273 = vsel %vm217, %v248, %v272
    %s275 = scalar_lea.vmem %s4, 8
    %276 = vst [vmem:[%s275] sm:$0xff] %v273
    %277 = vst.msk [vmem:[%s5] sm:$0xf] %vm86, %v127
    %278 = vst.msk [vmem:[#allocation2] sm:$0x1] %vm39, %v80
    // Predicated region
    $region18: #{spectral_norm_conv1x1_forward.1} parent=1 // pred_check
      _
    $region19: #{spectral_norm_conv1x1_forward.1} parent=1 // pred_check_branch
      %280 = sbr.rel (0) target = $region21
    $region20: #{spectral_norm_conv1x1_forward.1} parent=1 // pred_region
      _
    $region21: #{spectral_norm_conv1x1_forward.1} parent=1 // pred_fallthru
      _
    // Predicated region
    $region22: #{spectral_norm_conv1x1_forward.1} parent=1 // pred_check
      _
    $region23: #{spectral_norm_conv1x1_forward.1} parent=1 // pred_check_branch
      %282 = sbr.rel (0) target = $region25
    $region24: #{spectral_norm_conv1x1_forward.1} parent=1 // pred_region
      _
    $region25: #{spectral_norm_conv1x1_forward.1} parent=1 // pred_fallthru
      _
    // Predicated region
    $region26: #{spectral_norm_conv1x1_forward.1} parent=1 // pred_check
      _
    $region27: #{spectral_norm_conv1x1_forward.1} parent=1 // pred_check_branch
      %284 = sbr.rel (0) target = $region29
    $region28: #{spectral_norm_conv1x1_forward.1} parent=1 // pred_region
      %286 = vsyncadd [#allocation3], 0
      %s288 = sshll.u32 [#allocation2], 4
      %s289 = int_to_ptr.vmem [resolvable:$true] %s288
      %s290 = sshll.u32 %s6, 4
      %s291 = int_to_ptr.hbm [resolvable:$true] %s290
      %293 = dma.vmem_to_hbm [thread:$0]  %s289, 16, %s291, [#allocation3]
    $region29: #{spectral_norm_conv1x1_forward.1} parent=1 // pred_fallthru
      _
    // Predicated region
    $region30: #{spectral_norm_conv1x1_forward.1} parent=1 // pred_check
      _
    $region31: #{spectral_norm_conv1x1_forward.1} parent=1 // pred_check_branch
      %295 = sbr.rel (0) target = $region33
    $region32: #{spectral_norm_conv1x1_forward.1} parent=1 // pred_region
      _
    $region33: #{spectral_norm_conv1x1_forward.1} parent=1 // pred_fallthru
      _
    // Predicated region
    $region34: #{spectral_norm_conv1x1_forward.1} parent=1 // pred_check
      _
    $region35: #{spectral_norm_conv1x1_forward.1} parent=1 // pred_check_branch
      %297 = sbr.rel (0) target = $region37
    $region36: #{spectral_norm_conv1x1_forward.1} parent=1 // pred_region
      _
    $region37: #{spectral_norm_conv1x1_forward.1} parent=1 // pred_fallthru
      _
    // Predicated region
    $region38: #{spectral_norm_conv1x1_forward.1} parent=1 // pred_check
      _
    $region39: #{spectral_norm_conv1x1_forward.1} parent=1 // pred_check_branch
      %299 = sbr.rel (0) target = $region41
    $region40: #{spectral_norm_conv1x1_forward.1} parent=1 // pred_region
      %301 = dma.done [#allocation3], 16
    $region41: #{spectral_norm_conv1x1_forward.1} parent=1 // pred_fallthru
      _
    %302 = vsyncpa [#allocation3], 1

</llo_original>
